<compile_context>
chip_gen: v6e
topology: v6e:2x2x1
jax: 0.10.0
libtpu: 0.0.40
codegen_flags: <defaults>
</compile_context>

<pallas_src>
import jax
import jax.numpy as jnp
from jax.experimental import pallas as pl
from jax.experimental.pallas import tpu as pltpu


# ----------------------------------------------------------------------------
# Kernels
# ----------------------------------------------------------------------------
def _conv_stats_kernel(patches_ref, w_ref, sum_ref, sqsum_ref):
    """Pass 1: y = patches @ w (MXU, f32 acc); accumulate sum(y), sum(y^2).

    sum_ref / sqsum_ref use the accumulator pattern: their BlockSpec maps every
    grid step to block (0, 0), so they stay VMEM-resident across the (single,
    "arbitrary") M-tile axis and are written back to HBM once at the end.
    """
    @pl.when(pl.program_id(0) == 0)
    def _init():
        sum_ref[...] = jnp.zeros_like(sum_ref)
        sqsum_ref[...] = jnp.zeros_like(sqsum_ref)

    y = jnp.dot(patches_ref[...], w_ref[...],
                preferred_element_type=jnp.float32)          # (Mt, Cpad) f32
    sum_ref[...] += jnp.sum(y, axis=0, keepdims=True)        # (1, Cpad)
    sqsum_ref[...] += jnp.sum(y * y, axis=0, keepdims=True)  # (1, Cpad)


def _conv_bn_relu_kernel(patches_ref, w_ref, affine_ref, out_ref):
    """Pass 2: recompute the tile matmul, apply folded BN scale/shift + ReLU."""
    y = jnp.dot(patches_ref[...], w_ref[...],
                preferred_element_type=jnp.float32)          # (Mt, Cpad) f32
    aff = affine_ref[...]                                    # (2, Cpad): [scale; shift]
    out_ref[...] = jnp.maximum(y * aff[0:1, :] + aff[1:2, :], 0.0)


# ----------------------------------------------------------------------------
# Wrapper
# ----------------------------------------------------------------------------
def _im2col_nhwc(x, kh, kw, stride, padding):
    """(N,Cin,H,W) -> patches (M, K) with K ordered (kh, kw, Cin); M = N*Ho*Wo."""
    N, Cin, H, W = x.shape
    Ho = (H + 2 * padding - kh) // stride + 1
    Wo = (W + 2 * padding - kw) // stride + 1
    x_nhwc = jnp.transpose(x, (0, 2, 3, 1))                  # small NCHW->NHWC transpose
    xp = jnp.pad(x_nhwc, ((0, 0), (padding, padding), (padding, padding), (0, 0)))
    taps = []
    for i in range(kh):
        for j in range(kw):
            taps.append(xp[:, i:i + stride * (Ho - 1) + 1:stride,
                            j:j + stride * (Wo - 1) + 1:stride, :])
    patches = jnp.concatenate(taps, axis=-1)                 # (N, Ho, Wo, kh*kw*Cin)
    return patches.reshape(N * Ho * Wo, kh * kw * Cin), Ho, Wo


def conv_reg_forward(x, weight, bias, gamma, beta, *,
                     stride=2, padding=1, eps=1e-5, block_m=512):
    """ConvReg forward (s_H == 2*t_H branch). x: (N,Cin,H,W) NCHW; returns NCHW f32.

    `bias` is accepted for signature fidelity with nn.Conv2d but is NOT applied:
    training-mode BatchNorm subtracts the per-channel batch mean, which cancels
    a per-channel conv bias exactly.
    """
    del bias  # mathematically a no-op under training-mode BN
    N, Cin, H, W = x.shape
    Cout, _, kh, kw = weight.shape

    patches, Ho, Wo = _im2col_nhwc(x.astype(jnp.float32), kh, kw, stride, padding)
    M, K = patches.shape

    # ---- lane-dense channel padding & M tiling ---------------------------
    C_pad = ((Cout + 127) // 128) * 128
    assert block_m % 8 == 0, "block_m must be a multiple of 8 (sublanes)"
    block_m = min(block_m, ((M + 7) // 8) * 8)
    M_pad = pl.cdiv(M, block_m) * block_m
    if M_pad != M:
        # Zero rows contribute exactly 0 to sum/sumsq (no bias), so batch
        # statistics stay correct as long as we divide by the true M below.
        patches = jnp.pad(patches, ((0, M_pad - M), (0, 0)))

    # bf16 operands for the MXU; f32 accumulation + f32 BN math.
    patches = patches.astype(jnp.bfloat16)
    w = jnp.transpose(weight, (2, 3, 1, 0)).reshape(K, Cout)     # (kh,kw,Cin) K order
    w = jnp.pad(w, ((0, 0), (0, C_pad - Cout))).astype(jnp.bfloat16)

    n_m = M_pad // block_m
    patches_spec = pl.BlockSpec((block_m, K), lambda i: (i, 0))
    w_spec = pl.BlockSpec((K, C_pad), lambda i: (0, 0))
    vmem_limit = 32 * 1024 * 1024  # fits every chip's scoped VMEM (incl. v7x)

    # ---- pass 1: fused matmul + per-channel sum / sum-of-squares ----------
    stats_sum, stats_sq = pl.pallas_call(
        _conv_stats_kernel,
        out_shape=(jax.ShapeDtypeStruct((1, C_pad), jnp.float32),
                   jax.ShapeDtypeStruct((1, C_pad), jnp.float32)),
        grid=(n_m,),
        in_specs=[patches_spec, w_spec],
        out_specs=[pl.BlockSpec((1, C_pad), lambda i: (0, 0)),
                   pl.BlockSpec((1, C_pad), lambda i: (0, 0))],
        compiler_params=pltpu.CompilerParams(
            dimension_semantics=("arbitrary",),   # stats accumulated across tiles
            vmem_limit_bytes=vmem_limit),
    )(patches, w)

    # ---- BN finalize (tiny per-channel math; folded into scale/shift) -----
    inv_m = 1.0 / float(M)                              # true row count, not padded
    mean = stats_sum * inv_m
    var = stats_sq * inv_m - mean * mean                # biased variance (training BN)
    gamma_p = jnp.pad(gamma.astype(jnp.float32), (0, C_pad - Cout)).reshape(1, C_pad)
    beta_p = jnp.pad(beta.astype(jnp.float32), (0, C_pad - Cout)).reshape(1, C_pad)
    scale = gamma_p * jax.lax.rsqrt(var + eps)
    shift = beta_p - mean * scale
    affine = jnp.concatenate([scale, shift], axis=0)    # (2, C_pad)

    # ---- pass 2: recompute tile matmul, apply BN affine + ReLU ------------
    out = pl.pallas_call(
        _conv_bn_relu_kernel,
        out_shape=jax.ShapeDtypeStruct((M_pad, C_pad), jnp.float32),
        grid=(n_m,),
        in_specs=[patches_spec, w_spec,
                  pl.BlockSpec((2, C_pad), lambda i: (0, 0))],
        out_specs=pl.BlockSpec((block_m, C_pad), lambda i: (i, 0)),
        compiler_params=pltpu.CompilerParams(
            dimension_semantics=("parallel",),    # both v7x TensorCores work
            vmem_limit_bytes=vmem_limit),
    )(patches, w, affine)

    # (M_pad, C_pad) -> (M, Cout) -> NHWC -> NCHW
    out = out[:M, :Cout].reshape(N, Ho, Wo, Cout)
    return jnp.transpose(out, (0, 3, 1, 2))


# ----------------------------------------------------------------------------
# Pure-JAX reference (PyTorch semantics): conv(+bias) + training-mode BN + ReLU
# ----------------------------------------------------------------------------
def _reference(x, weight, bias, gamma, beta, *, stride=2, padding=1):
    y = jax.lax.conv_general_dilated(
        x.astype(jnp.float32), weight.astype(jnp.float32),
        window_strides=(stride, stride),
        padding=((padding, padding), (padding, padding)),
        dimension_numbers=("NCHW", "OIHW", "NCHW"))
    y = y + bias.reshape(1, -1, 1, 1)
    mean = jnp.mean(y, axis=(0, 2, 3), keepdims=True)
    var = jnp.mean((y - mean) ** 2, axis=(0, 2, 3), keepdims=True)
    xhat = (y - mean) * jax.lax.rsqrt(var + 1e-5)
    out = gamma.reshape(1, -1, 1, 1) * xhat + beta.reshape(1, -1, 1, 1)
    return jnp.maximum(out, 0.0)


if __name__ == "__main__":
    # s_shape = (2, 4, 16, 16), t_shape = (2, 8, 8, 8)  ->  s_H == 2*t_H branch.
    N, Cin, H, W = 2, 4, 16, 16
    Cout, kh, kw = 8, 3, 3

    key = jax.random.PRNGKey(0)
    kx, kw_, kb, kg, kbe = jax.random.split(key, 5)
    x = jax.random.normal(kx, (N, Cin, H, W), dtype=jnp.float32)
    weight = 0.1 * jax.random.normal(kw_, (Cout, Cin, kh, kw), dtype=jnp.float32)
    bias = 0.1 * jax.random.normal(kb, (Cout,), dtype=jnp.float32)
    gamma = 1.0 + 0.1 * jax.random.normal(kg, (Cout,), dtype=jnp.float32)
    beta = 0.1 * jax.random.normal(kbe, (Cout,), dtype=jnp.float32)

    # block_m=64 so the toy problem (M = 2*8*8 = 128 rows) still exercises the
    # multi-tile pipeline and the cross-tile statistics accumulation.
    out = conv_reg_forward(x, weight, bias, gamma, beta, block_m=64)
    out = jax.block_until_ready(out)
    assert out.shape == (N, Cout, H // 2, W // 2), out.shape

    # Tight check vs a reference fed the same bf16-rounded conv operands
    # (isolates kernel math from the deliberate bf16-MXU quantization) ...
    ref_bf16 = _reference(
        x.astype(jnp.bfloat16).astype(jnp.float32),
        weight.astype(jnp.bfloat16).astype(jnp.float32),
        bias, gamma, beta)
    assert jnp.allclose(out, ref_bf16, atol=1e-3, rtol=1e-3), (
        "mismatch vs bf16-operand reference, max abs err = "
        + str(float(jnp.max(jnp.abs(out - ref_bf16)))))

    # ... and a loose sanity check vs the pure-f32 PyTorch-equivalent reference
    # (bf16 MXU operands introduce ~1e-2-level differences at worst).
    ref_f32 = _reference(x, weight, bias, gamma, beta)
    assert jnp.allclose(out, ref_f32, atol=5e-2, rtol=5e-2), (
        "mismatch vs f32 reference, max abs err = "
        + str(float(jnp.max(jnp.abs(out - ref_f32)))))

    print("KERNEL_OK")
</pallas_src>

<mosaic_0001>
module attributes {stable_mosaic.version = 11 : i64} {
  func.func @_conv_stats_kernel(%arg0: i32, %arg1: memref<64x36xbf16, #tpu.memory_space<vmem>>, %arg2: memref<36x128xbf16, #tpu.memory_space<vmem>>, %arg3: memref<1x128xf32, #tpu.memory_space<vmem>>, %arg4: memref<1x128xf32, #tpu.memory_space<vmem>>) attributes {dimension_semantics = [#tpu.dimension_semantics<arbitrary>], iteration_bounds = array<i64: 2>, scalar_prefetch = 0 : i64, scratch_operands = 0 : i64, tpu.core_type = #tpu.core_type<tc>, window_params = [{transform_indices = @transform_0, window_bounds = array<i64: 64, 36>}, {pipeline_mode = #tpu.pipeline_mode<synchronous>, transform_indices = @transform_1, window_bounds = array<i64: 36, 128>}, {pipeline_mode = #tpu.pipeline_mode<synchronous>, transform_indices = @transform_2, window_bounds = array<i64: 1, 128>}, {pipeline_mode = #tpu.pipeline_mode<synchronous>, transform_indices = @transform_3, window_bounds = array<i64: 1, 128>}]} {
    %c0_i32 = arith.constant 0 : i32
    %0 = arith.cmpi eq, %arg0, %c0_i32 : i32
    %1 = arith.extui %0 : i1 to i32
    %c0_i32_0 = arith.constant 0 : i32
    %2 = arith.cmpi ne, %1, %c0_i32_0 : i32
    scf.if %2 {
      %cst_14 = arith.constant 0.000000e+00 : f32
      %17 = vector.broadcast %cst_14 : f32 to vector<1x128xf32>
      %c0_15 = arith.constant 0 : index
      %c0_16 = arith.constant 0 : index
      %18 = vector.load %arg3[%c0_15, %c0_16] : memref<1x128xf32, #tpu.memory_space<vmem>>, vector<1x128xf32>
      tpu.vector_store %arg3[%c0_15, %c0_16], %17 {strides = array<i32>} : memref<1x128xf32, #tpu.memory_space<vmem>>, vector<1x128xf32>,
      %cst_17 = arith.constant 0.000000e+00 : f32
      %19 = vector.broadcast %cst_17 : f32 to vector<1x128xf32>
      %c0_18 = arith.constant 0 : index
      %c0_19 = arith.constant 0 : index
      %20 = vector.load %arg4[%c0_18, %c0_19] : memref<1x128xf32, #tpu.memory_space<vmem>>, vector<1x128xf32>
      tpu.vector_store %arg4[%c0_18, %c0_19], %19 {strides = array<i32>} : memref<1x128xf32, #tpu.memory_space<vmem>>, vector<1x128xf32>,
    } else {
    }
    %c0 = arith.constant 0 : index
    %c0_1 = arith.constant 0 : index
    %3 = vector.load %arg1[%c0, %c0_1] : memref<64x36xbf16, #tpu.memory_space<vmem>>, vector<64x36xbf16>
    %c0_2 = arith.constant 0 : index
    %c0_3 = arith.constant 0 : index
    %4 = vector.load %arg2[%c0_2, %c0_3] : memref<36x128xbf16, #tpu.memory_space<vmem>>, vector<36x128xbf16>
    %cst = arith.constant dense<0.000000e+00> : vector<64x128xf32>
    %5 = tpu.matmul %3, %4, %cst {dimension_numbers = #tpu.dot_dimension_numbers<[1], [0], [0], [1], [0, 0, 1, 1], [], []>} : vector<64x36xbf16>, vector<36x128xbf16>, vector<64x128xf32> -> vector<64x128xf32>
    %c0_4 = arith.constant 0 : index
    %c0_5 = arith.constant 0 : index
    %6 = vector.load %arg3[%c0_4, %c0_5] : memref<1x128xf32, #tpu.memory_space<vmem>>, vector<1x128xf32>
    %cst_6 = arith.constant dense<0.000000e+00> : vector<128xf32>
    %7 = vector.multi_reduction <add>, %5, %cst_6 [0] : vector<64x128xf32> to vector<128xf32>
    %8 = vector.shape_cast %7 : vector<128xf32> to vector<1x128xf32>
    %9 = arith.addf %6, %8 : vector<1x128xf32>
    %c0_7 = arith.constant 0 : index
    %c0_8 = arith.constant 0 : index
    %10 = vector.load %arg3[%c0_7, %c0_8] : memref<1x128xf32, #tpu.memory_space<vmem>>, vector<1x128xf32>
    tpu.vector_store %arg3[%c0_7, %c0_8], %9 {strides = array<i32>} : memref<1x128xf32, #tpu.memory_space<vmem>>, vector<1x128xf32>,
    %c0_9 = arith.constant 0 : index
    %c0_10 = arith.constant 0 : index
    %11 = vector.load %arg4[%c0_9, %c0_10] : memref<1x128xf32, #tpu.memory_space<vmem>>, vector<1x128xf32>
    %12 = arith.mulf %5, %5 : vector<64x128xf32>
    %cst_11 = arith.constant dense<0.000000e+00> : vector<128xf32>
    %13 = vector.multi_reduction <add>, %12, %cst_11 [0] : vector<64x128xf32> to vector<128xf32>
    %14 = vector.shape_cast %13 : vector<128xf32> to vector<1x128xf32>
    %15 = arith.addf %11, %14 : vector<1x128xf32>
    %c0_12 = arith.constant 0 : index
    %c0_13 = arith.constant 0 : index
    %16 = vector.load %arg4[%c0_12, %c0_13] : memref<1x128xf32, #tpu.memory_space<vmem>>, vector<1x128xf32>
    tpu.vector_store %arg4[%c0_12, %c0_13], %15 {strides = array<i32>} : memref<1x128xf32, #tpu.memory_space<vmem>>, vector<1x128xf32>,
    return
  }
  func.func @transform_0(%arg0: i32) -> (i32, i32) {
    %c0_i32 = arith.constant 0 : i32
    %c0_i32_0 = arith.constant 0 : i32
    return %arg0, %c0_i32 : i32, i32
  }
  func.func @transform_1(%arg0: i32) -> (i32, i32) {
    %c0_i32 = arith.constant 0 : i32
    %c0_i32_0 = arith.constant 0 : i32
    %c0_i32_1 = arith.constant 0 : i32
    return %c0_i32, %c0_i32_0 : i32, i32
  }
  func.func @transform_2(%arg0: i32) -> (i32, i32) {
    %c0_i32 = arith.constant 0 : i32
    %c0_i32_0 = arith.constant 0 : i32
    %c0_i32_1 = arith.constant 0 : i32
    return %c0_i32, %c0_i32_0 : i32, i32
  }
  func.func @transform_3(%arg0: i32) -> (i32, i32) {
    %c0_i32 = arith.constant 0 : i32
    %c0_i32_0 = arith.constant 0 : i32
    %c0_i32_1 = arith.constant 0 : i32
    return %c0_i32, %c0_i32_0 : i32, i32
  }
}

</mosaic_0001>

<llo_original>
// kernel: tpu_custom_call.1
$region0: #{tpu_custom_call.1}
  #allocation0 [shape = 'u32[]', space=smem, size = 0x4, offset = 0x4, fixed_abs, tag = 'smem constant byte address 0x4 - core index']
  #allocation1 [shape = 'u32[144,128]{1,0:T(1,128)}', space=vmem, size = 0x12000, scoped, tag = 'internal scratch']
  %s0 = inlined_call_operand.vmem [shape: bf16[128,36], index: 0, kind: input, shape index: {}]
  %s1 = inlined_call_operand.vmem [shape: bf16[36,128], index: 1, kind: input, shape index: {}]
  %s2 = inlined_call_operand.hbm [shape: f32[1,128], index: 2, kind: output, shape index: {0}]
  %s3 = inlined_call_operand.hbm [shape: f32[1,128], index: 3, kind: output, shape index: {1}]
  %4 = xla_tuple %s2, %s3
  %s5 = sld [smem:[#allocation0]]
  $region53: #{tpu_custom_call.1} parent=0
    _
  %s7 = ssub.s32 1, %s5
  %s8 = scalar_select 0, %s7, %s5
  $region1: #{tpu_custom_call.1} parent=0
    #allocation2 [shape = 'u8[512]{0}', space=vmem, size = 0x400, scoped, tag = 'output window, operand 0, single buffered']
    #allocation3 [shape = 's32[2]{0}', space=sflag, size = 0x8, scoped, tag = 'scoped memory for tpu_custom_call.1']
    #allocation4 [shape = 'u8[512]{0}', space=vmem, size = 0x400, scoped, tag = 'output window, operand 1, single buffered']
    #allocation5 [shape = 's32[1]{0}', space=sflag, size = 0x4, scoped, tag = 'scoped memory for tpu_custom_call.1']
    %9 = vsyncpa [#allocation3], 0
    %10 = vsyncpa [#allocation5], 0
    loop: start=0, step=1, limit=4
    $region2: #{tpu_custom_call.1} parent=1 // loop_pre_header
      _
    $region3: #{tpu_custom_call.1} parent=1 // loop_header
      %s12 = sphi 0, %s16
      %p13 = scmp.ge.s32.totalorder %s12, 4
      %s22 = sphi 0, %s24
      %s25 = sphi 0, %s22
      %s26 = sphi 0, %s25
      %s42 = sphi 0, %s26
      %s46 = sphi 0, %s46
      %s48 = sphi 0, %s46
      %s49 = sphi 0, %s48
      %s63 = sphi 0, %s49
      %s67 = sphi 0, %s67
      %s69 = sphi 0, %s67
      %s70 = sphi 0, %s69
      %s84 = sphi 0, %s70
      %s88 = sphi 0, %s88
      %s90 = sphi 0, %s88
      %s91 = sphi 0, %s90
      %s105 = sphi 0, %s91
    $region4: #{tpu_custom_call.1} parent=1 // loop_header_branch
      %15 = sbr.rel (%p13) target = $region8
    $region5: #{tpu_custom_call.1} parent=1 // loop_body
      %s17 = ssub.s32 %s12, 1
      %s18 = ssub.s32 %s12, 2
      %s19 = sadd.s32 %s12, 1
      %s20 = ssub.s32 %s12, %s19
      %p21 = scmp.eq.s32.totalorder %s20, 0
      %s23 = sadd.s32 %s22, 1
      %s24 = scalar_select %p21, %s22, %s23
      %p27 = pneg %p21
      %p28 = scmp.eq.s32.totalorder %s12, 1
      %p29 = por %p27, %p28
      %p30 = scmp.ne.s32.totalorder %s22, %s25
      %p31 = scmp.eq.s32.totalorder %s12, 0
      %p32 = por %p30, %p31
      %p33 = scmp.ne.s32.totalorder %s22, %s25
      %p34 = scmp.eq.s32.totalorder %s17, 1
      %p35 = por %p33, %p34
      %p36 = scmp.ne.s32.totalorder %s25, %s26
      %p37 = scmp.eq.s32.totalorder %s17, 0
      %p38 = por %p36, %p37
      %p39 = scmp.ne.s32.totalorder %s25, %s26
      %p40 = scmp.eq.s32.totalorder %s18, 1
      %p41 = por %p39, %p40
      %p43 = scmp.ne.s32.totalorder %s26, %s42
      %p44 = scmp.eq.s32.totalorder %s18, 0
      %p45 = por %p43, %p44
      %s47 = sadd.s32 %s46, 1
      %p50 = scmp.eq.s32.totalorder %s12, 1
      %p51 = scmp.ne.s32.totalorder %s46, %s48
      %p52 = scmp.eq.s32.totalorder %s12, 0
      %p53 = por %p51, %p52
      %p54 = scmp.ne.s32.totalorder %s46, %s48
      %p55 = scmp.eq.s32.totalorder %s17, 1
      %p56 = por %p54, %p55
      %p57 = scmp.ne.s32.totalorder %s48, %s49
      %p58 = scmp.eq.s32.totalorder %s17, 0
      %p59 = por %p57, %p58
      %p60 = scmp.ne.s32.totalorder %s48, %s49
      %p61 = scmp.eq.s32.totalorder %s18, 1
      %p62 = por %p60, %p61
      %p64 = scmp.ne.s32.totalorder %s49, %s63
      %p65 = scmp.eq.s32.totalorder %s18, 0
      %p66 = por %p64, %p65
      %s68 = sadd.s32 %s67, 1
      %p71 = scmp.eq.s32.totalorder %s12, 1
      %p72 = scmp.ne.s32.totalorder %s67, %s69
      %p73 = scmp.eq.s32.totalorder %s12, 0
      %p74 = por %p72, %p73
      %p75 = scmp.ne.s32.totalorder %s67, %s69
      %p76 = scmp.eq.s32.totalorder %s17, 1
      %p77 = por %p75, %p76
      %p78 = scmp.ne.s32.totalorder %s69, %s70
      %p79 = scmp.eq.s32.totalorder %s17, 0
      %p80 = por %p78, %p79
      %p81 = scmp.ne.s32.totalorder %s69, %s70
      %p82 = scmp.eq.s32.totalorder %s18, 1
      %p83 = por %p81, %p82
      %p85 = scmp.ne.s32.totalorder %s70, %s84
      %p86 = scmp.eq.s32.totalorder %s18, 0
      %p87 = por %p85, %p86
      %s89 = sadd.s32 %s88, 1
      %p92 = scmp.eq.s32.totalorder %s12, 1
      %p93 = scmp.ne.s32.totalorder %s88, %s90
      %p94 = scmp.eq.s32.totalorder %s12, 0
      %p95 = por %p93, %p94
      %p96 = scmp.ne.s32.totalorder %s88, %s90
      %p97 = scmp.eq.s32.totalorder %s17, 1
      %p98 = por %p96, %p97
      %p99 = scmp.ne.s32.totalorder %s90, %s91
      %p100 = scmp.eq.s32.totalorder %s17, 0
      %p101 = por %p99, %p100
      %p102 = scmp.ne.s32.totalorder %s90, %s91
      %p103 = scmp.eq.s32.totalorder %s18, 1
      %p104 = por %p102, %p103
      %p106 = scmp.ne.s32.totalorder %s91, %s105
      %p107 = scmp.eq.s32.totalorder %s18, 0
      %p108 = por %p106, %p107
      %p109 = scmp.le.s32.totalorder 1, %s12
      %p110 = scmp.lt.s32.totalorder %s12, 3
      %p111 = pnand %p109, %p110
      %p112 = pneg %p111
      // Predicated region
      $region9: #{tpu_custom_call.1} parent=5 // pred_check
        _
      $region10: #{tpu_custom_call.1} parent=5 // pred_check_branch
        %114 = sbr.rel (%p111) target = $region12
      $region11: #{tpu_custom_call.1} parent=5 // pred_region
        %s115 = ssub.s32 %s12, 1
        // Predicated region
        $region13: #{tpu_custom_call.1} parent=11 // pred_check
          %p116 = pneg %p59
        $region14: #{tpu_custom_call.1} parent=11 // pred_check_branch
          %118 = sbr.rel (%p116) target = $region16
        $region15: #{tpu_custom_call.1} parent=11 // pred_region
          _
        $region16: #{tpu_custom_call.1} parent=11 // pred_fallthru
          _
      $region12: #{tpu_custom_call.1} parent=5 // pred_fallthru
        _
      %p119 = scmp.lt.s32.totalorder %s12, 2
      // Predicated region
      $region17: #{tpu_custom_call.1} parent=5 // pred_check
        %p120 = pneg %p119
      $region18: #{tpu_custom_call.1} parent=5 // pred_check_branch
        %122 = sbr.rel (%p120) target = $region20
      $region19: #{tpu_custom_call.1} parent=5 // pred_region
        // Predicated region
        $region21: #{tpu_custom_call.1} parent=19 // pred_check
          %p123 = pneg %p32
        $region22: #{tpu_custom_call.1} parent=19 // pred_check_branch
          %125 = sbr.rel (%p123) target = $region24
        $region23: #{tpu_custom_call.1} parent=19 // pred_region
          %s126 = smul.u32 8, %s12
          %p127 = scmp.lt.s32.totalorder %s126, 15
          %s128 = scalar_select %p127, %s126, 15
          %s129 = smul.addr %s128, 4
          %s130 = scalar_lea.vmem %s0, %s129
          %s131 = smul.u32 8, %s12
        $region24: #{tpu_custom_call.1} parent=19 // pred_fallthru
          _
      $region20: #{tpu_custom_call.1} parent=5 // pred_fallthru
        _
      %p132 = scmp.le.s32.totalorder 1, %s12
      %p133 = scmp.lt.s32.totalorder %s12, 3
      %p134 = pnand %p132, %p133
      %p135 = pneg %p134
      // Predicated region
      $region25: #{tpu_custom_call.1} parent=5 // pred_check
        _
      $region26: #{tpu_custom_call.1} parent=5 // pred_check_branch
        %137 = sbr.rel (%p134) target = $region28
      $region27: #{tpu_custom_call.1} parent=5 // pred_region
        %s138 = ssub.s32 %s12, 1
        %s139 = smul.u32 8, %s17
        %p140 = scmp.lt.s32.totalorder %s139, 15
        %s141 = scalar_select %p140, %s139, 15
        %s142 = smul.addr %s141, 4
        %s143 = scalar_lea.vmem %s0, %s142
        %p144 = pneg %p38
        %p145 = pneg %p35
        %p146 = pneg %p59
        %p147 = pneg %p56
        %p148 = pneg %p80
        %p149 = pneg %p77
        %p150 = pneg %p101
        %p151 = pneg %p98
        %s152 = smul.u32 8, %s17
        %p153 = scmp.lt.s32.totalorder %s152, 15
        %s154 = scalar_select %p153, %s152, 15
        %s155 = smul.addr %s154, 4
        %s156 = scalar_lea.vmem %s0, %s155
        %s157 = smul.u32 8, %s17
        %p159 = scmp.eq.s32.totalorder %s17, 0
        // Predicated region
        $region29: #{tpu_custom_call.1} parent=27 // pred_check
          %p160 = pneg %p159
        $region30: #{tpu_custom_call.1} parent=27 // pred_check_branch
          %162 = sbr.rel (%p160) target = $region32
        $region31: #{tpu_custom_call.1} parent=27 // pred_region
          %163 = vst [vmem:[#allocation2] sm:$0x1] 0.0
          %164 = vst [vmem:[#allocation4] sm:$0x1] 0.0
        $region32: #{tpu_custom_call.1} parent=27 // pred_fallthru
          _
        %v165 = vld [vmem:[%s156] sm:$0xf]
        %v166 = vld [vmem:[%s156 + $0x4] sm:$0xf]
        %v167 = vld [vmem:[%s156 + $0x8] sm:$0xf]
        %v168 = vld [vmem:[%s156 + $0xc] sm:$0xf]
        %v169 = vld [vmem:[%s156 + $0x10] sm:$0xf]
        %v170 = vld [vmem:[%s156 + $0x14] sm:$0xf]
        %v171 = vld [vmem:[%s156 + $0x18] sm:$0xf]
        %v172 = vld [vmem:[%s156 + $0x1c] sm:$0xf]
        %v173 = vld [vmem:[%s1] sm:$0xf]
        %v174 = vld [vmem:[%s1 + $0x4] sm:$0xf]
        %v175 = vld [vmem:[%s1 + $0x8] sm:$0xf]
        %v176 = vld [vmem:[%s1 + $0xc] sm:$0xf]
        %v177 = vld [vmem:[%s1 + $0x10] sm:$0x3]
        %v186 = vunpack.c.l.b16 %v165
        %v187 = vunpack.c.l.b16 %v166
        %v188 = vunpack.c.l.b16 %v167
        %v189 = vunpack.c.l.b16 %v168
        %v190 = vunpack.c.l.b16 %v169
        %v191 = vunpack.c.l.b16 %v170
        %v192 = vunpack.c.l.b16 %v171
        %v193 = vunpack.c.l.b16 %v172
        %v194 = vpack.c.b16 %v187, %v186
        %v195 = vpack.c.b16 %v189, %v188
        %v196 = vpack.c.b16 %v191, %v190
        %v197 = vpack.c.b16 %v193, %v192
        %v203 = vunpack.c.l.b16 %v173
        %v204 = vunpack.c.l.b16 %v174
        %v205 = vunpack.c.l.b16 %v175
        %v206 = vunpack.c.l.b16 %v176
        %v207 = vunpack.c.l.b16 %v177
        %v208 = vpack.c.b16 %v204, %v203
        %v209 = vpack.c.b16 %v206, %v205
        %v210 = vpack.c.b16 %v207, %v207
        %vm213 = vcmask 293888
        %v215 = vsel %vm213, %v194, 0
        %v218 = vsel %vm213, %v195, 0
        %v221 = vsel %vm213, %v196, 0
        %v224 = vsel %vm213, %v197, 0
        %vm226 = vcmask 1041408
        %v228 = vsel %vm226, %v210, 0
        %230 = vmatprep.subr.bf16.mxu0 0
        %231 = vmatpush1.bf16.msra.mxu0 0
        %232 = vmatprep.subr.bf16.mxu0 0
        %233 = vmatpush1.bf16.msra.mxu0 0
        %234 = vmatprep.subr.bf16.mxu0 0
        %235 = vmatpush1.bf16.msra.mxu0 0
        %236 = vmatprep.subr.bf16.mxu0 0
        %237 = vmatpush1.bf16.msra.mxu0 0
        %238 = vmatprep.subr.bf16.mxu0 0
        %239 = vmatpush1.bf16.msra.mxu0 0
        %240 = vmatprep.subr.bf16.mxu0 0
        %241 = vmatpush1.bf16.msra.mxu0 %v228
        %242 = vmatprep.subr.bf16.mxu0 0
        %243 = vmatpush1.bf16.msra.mxu0 %v209
        %244 = vmatprep.subr.bf16.mxu0 0
        %245 = vmatpush1.bf16.msra.mxu0 %v208
        %246 = vmatprep.subr.bf16.mxu0 0
        %247 = vmatpush2.bf16.msra.mxu0 0
        %248 = vmatprep.subr.bf16.mxu0 0
        %249 = vmatpush2.bf16.msra.mxu0 0
        %250 = vmatprep.subr.bf16.mxu0 0
        %251 = vmatpush2.bf16.msra.mxu0 0
        %252 = vmatprep.subr.bf16.mxu0 0
        %253 = vmatpush2.bf16.msra.mxu0 0
        %254 = vmatprep.subr.bf16.mxu0 0
        %255 = vmatpush2.bf16.msra.mxu0 0
        %256 = vmatprep.subr.bf16.mxu0 0
        %257 = vmatpush2.bf16.msra.mxu0 0
        %258 = vmatprep.subr.bf16.mxu0 0
        %259 = vmatpush2.bf16.msra.mxu0 0
        %260 = vmatprep.subr.bf16.mxu0 0
        %261 = vmatpush2.bf16.msra.mxu0 0
        %262 = vmatprep.mubr.bf16.mxu0 0
        %263 = vmatmul.mubr.bf16.gmra.mxu0 %v215
        %v264 = vpop.f32.mrf.mxu0
        %v265 = vadd.f32 0.0, %v264
        %v266 = vpop.f32.mrf.mxu0
        %v267 = vpop.f32.mrf.mxu0
        %v268 = vadd.f32 0.0, %v267
        %v269 = vpop.f32.mrf.mxu0
        %270 = vmatprep.mubr.bf16.mxu0 0
        %271 = vmatmul.mubr.bf16.gmra.mxu0 %v218
        %v272 = vpop.f32.mrf.mxu0
        %v273 = vadd.f32 0.0, %v272
        %v274 = vpop.f32.mrf.mxu0
        %v275 = vpop.f32.mrf.mxu0
        %v276 = vadd.f32 0.0, %v275
        %v277 = vpop.f32.mrf.mxu0
        %278 = vmatprep.mubr.bf16.mxu0 0
        %279 = vmatmul.mubr.bf16.gmra.mxu0 %v221
        %v280 = vpop.f32.mrf.mxu0
        %v281 = vadd.f32 0.0, %v280
        %v282 = vpop.f32.mrf.mxu0
        %v283 = vpop.f32.mrf.mxu0
        %v284 = vadd.f32 0.0, %v283
        %v285 = vpop.f32.mrf.mxu0
        %286 = vmatprep.mubr.bf16.mxu0 0
        %287 = vmatmul.mubr.bf16.gmra.mxu0 %v224
        %v288 = vpop.f32.mrf.mxu0
        %v289 = vadd.f32 0.0, %v288
        %v290 = vpop.f32.mrf.mxu0
        %v291 = vpop.f32.mrf.mxu0
        %v292 = vadd.f32 0.0, %v291
        %v293 = vpop.f32.mrf.mxu0
        %294 = vdwg.mxu0
        %v295 = vld [vmem:[#allocation2] sm:$0x1]
        %v296 = vadd.f32 %v265, %v268
        %v297 = vadd.f32 %v296, %v273
        %v298 = vadd.f32 %v297, %v276
        %v299 = vadd.f32 %v298, %v281
        %v300 = vadd.f32 %v299, %v284
        %v301 = vadd.f32 %v300, %v289
        %v302 = vadd.f32 %v301, %v292
        %v303 = vrot.slane %v302, 4
        %v304 = vadd.f32 %v302, %v303
        %v305 = vrot.slane %v304, 2
        %v306 = vadd.f32 %v304, %v305
        %v307 = vrot.slane %v306, 1
        %v308 = vadd.f32 %v306, %v307
        %v309 = vadd.f32 %v295, %v308
        %310 = vst [vmem:[#allocation2] sm:$0x1] %v309
        %v311 = vld [vmem:[#allocation4] sm:$0x1]
        %v312 = vmul.f32 %v265, %v265
        %v313 = vmul.f32 %v268, %v268
        %v314 = vmul.f32 %v273, %v273
        %v315 = vmul.f32 %v276, %v276
        %v316 = vmul.f32 %v281, %v281
        %v317 = vmul.f32 %v284, %v284
        %v318 = vmul.f32 %v289, %v289
        %v319 = vmul.f32 %v292, %v292
        %v320 = vadd.f32 %v312, %v313
        %v321 = vadd.f32 %v320, %v314
        %v322 = vadd.f32 %v321, %v315
        %v323 = vadd.f32 %v322, %v316
        %v324 = vadd.f32 %v323, %v317
        %v325 = vadd.f32 %v324, %v318
        %v326 = vadd.f32 %v325, %v319
        %v327 = vrot.slane %v326, 4
        %v328 = vadd.f32 %v326, %v327
        %v329 = vrot.slane %v328, 2
        %v330 = vadd.f32 %v328, %v329
        %v331 = vrot.slane %v330, 1
        %v332 = vadd.f32 %v330, %v331
        %v333 = vadd.f32 %v311, %v332
        %334 = vst [vmem:[#allocation4] sm:$0x1] %v333
        // Predicated region
        $region33: #{tpu_custom_call.1} parent=27 // pred_check
          %p335 = pneg %p77
        $region34: #{tpu_custom_call.1} parent=27 // pred_check_branch
          %337 = sbr.rel (%p335) target = $region36
        $region35: #{tpu_custom_call.1} parent=27 // pred_region
          %s339 = ssub.s32 16, 16
          %340 = vsyncadd [#allocation3], %s339
          %s342 = sshll.u32 [#allocation2], 4
          %s343 = int_to_ptr.vmem [resolvable:$true] %s342
          %345 = dma.vmem_to_hbm [thread:$0]  %s343, 16, %s2, [#allocation3]
        $region36: #{tpu_custom_call.1} parent=27 // pred_fallthru
          _
        // Predicated region
        $region37: #{tpu_custom_call.1} parent=27 // pred_check
          %p346 = pneg %p98
        $region38: #{tpu_custom_call.1} parent=27 // pred_check_branch
          %348 = sbr.rel (%p346) target = $region40
        $region39: #{tpu_custom_call.1} parent=27 // pred_region
          %s350 = ssub.s32 16, 16
          %351 = vsyncadd [#allocation5], %s350
          %s353 = sshll.u32 [#allocation4], 4
          %s354 = int_to_ptr.vmem [resolvable:$true] %s353
          %356 = dma.vmem_to_hbm [thread:$0]  %s354, 16, %s3, [#allocation5]
        $region40: #{tpu_custom_call.1} parent=27 // pred_fallthru
          _
        // Predicated region
        $region41: #{tpu_custom_call.1} parent=27 // pred_check
          %p357 = pneg %p77
        $region42: #{tpu_custom_call.1} parent=27 // pred_check_branch
          %359 = sbr.rel (%p357) target = $region44
        $region43: #{tpu_custom_call.1} parent=27 // pred_region
          %360 = dma.done [#allocation3], 16
        $region44: #{tpu_custom_call.1} parent=27 // pred_fallthru
          _
        // Predicated region
        $region45: #{tpu_custom_call.1} parent=27 // pred_check
          %p361 = pneg %p98
        $region46: #{tpu_custom_call.1} parent=27 // pred_check_branch
          %363 = sbr.rel (%p361) target = $region48
        $region47: #{tpu_custom_call.1} parent=27 // pred_region
          %364 = dma.done [#allocation5], 16
        $region48: #{tpu_custom_call.1} parent=27 // pred_fallthru
          _
      $region28: #{tpu_custom_call.1} parent=5 // pred_fallthru
        _
      %p365 = scmp.le.s32.totalorder 2, %s12
      // Predicated region
      $region49: #{tpu_custom_call.1} parent=5 // pred_check
        %p366 = pneg %p365
      $region50: #{tpu_custom_call.1} parent=5 // pred_check_branch
        %368 = sbr.rel (%p366) target = $region52
      $region51: #{tpu_custom_call.1} parent=5 // pred_region
        %s369 = ssub.s32 %s12, 2
      $region52: #{tpu_custom_call.1} parent=5 // pred_fallthru
        _
    $region6: #{tpu_custom_call.1} parent=1 // loop_footer
      %s16 = sadd.s32 1, %s12
    $region7: #{tpu_custom_call.1} parent=1 // loop_footer_branch
      %11 = sbr.rel target = $region3
    $region8: #{tpu_custom_call.1} parent=1 // loop_exit
      _
    %370 = vsyncpa [#allocation3], 1
    %s371 = scalar_lea.sflag [#allocation3], 1
    %372 = vsyncpa %s371, 1
    %373 = vsyncpa [#allocation5], 1

</llo_original>
